<compile_context>
chip_gen: v5e
topology: v5e:2x2
jax: 0.10.0
libtpu: 0.0.40
codegen_flags: <defaults>
</compile_context>

<pallas_src>
import jax
import jax.numpy as jnp
from jax.experimental import pallas as pl
from jax.experimental.pallas import tpu as pltpu


def _make_kernel(num_prods):
    P = num_prods

    def kernel(x_ref, o_ref):
        # x_ref: (1, CB, TS) VMEM block (CB >= 2P, TS lane-dense).
        # o_ref: (1, P,  TS) VMEM block.
        x = x_ref[...]
        # Static sublane slices + one concatenate -> a single dense store.
        prods = [
            x[:, 2 * i : 2 * i + 1, :] * x[:, 2 * i + 1 : 2 * i + 2, :]
            for i in range(P)
        ]
        out = prods[0] if P == 1 else jnp.concatenate(prods, axis=1)
        o_ref[...] = out.astype(o_ref.dtype)

    return kernel


def _choose_spatial_tile(S, cb, num_prods, itemsize, max_block_bytes=2 * 1024 * 1024):
    """Largest spatial tile TS such that:
      * TS divides S,
      * TS is a multiple of 128 (lane-dense) or TS == S (full-dim block),
      * the combined (input + output) block stays under max_block_bytes.
    """
    if S % 128 != 0:
        # Full spatial extent: always satisfies the "equal to full dim" rule.
        return S
    per_lane_bytes = (cb + num_prods) * itemsize
    max_ts = max(128, max_block_bytes // per_lane_bytes)
    best = 128
    n128 = S // 128
    for k in range(1, n128 + 1):
        if n128 % k == 0:
            ts = 128 * k
            if ts <= max_ts:
                best = ts
    return best


def product_path(x, num_prods):
    """x: (B, C, H, W) -> (B, num_prods, H, W) with out[:, i] = x[:, 2i] * x[:, 2i+1]."""
    B, C, H, W = x.shape
    assert C >= 2 * num_prods, "Error: in_dim < 2*num_prods!"
    P = num_prods
    S = H * W
    itemsize = jnp.dtype(x.dtype).itemsize

    # Only DMA channels [0, 2P) when the sublane tiling rule allows it
    # (block second-to-last dim must be a multiple of 8 or the full dim).
    two_p = 2 * P
    if two_p == C or two_p % 8 == 0:
        cb = two_p
    else:
        cb = C  # fallback: reads a few unused channels (bandwidth, not correctness)

    # Lane-dense view: last dim is H*W (handled by XLA in the wrapper).
    x_flat = x.reshape(B, C, S)

    ts = _choose_spatial_tile(S, cb, P, itemsize)
    n_s = S // ts

    out_flat = pl.pallas_call(
        _make_kernel(P),
        out_shape=jax.ShapeDtypeStruct((B, P, S), x.dtype),
        grid_spec=pltpu.PrefetchScalarGridSpec(
            num_scalar_prefetch=0,
            grid=(B, n_s),
            in_specs=[pl.BlockSpec((1, cb, ts), lambda b, s: (b, 0, s))],
            out_specs=pl.BlockSpec((1, P, ts), lambda b, s: (b, 0, s)),
        ),
        compiler_params=pltpu.CompilerParams(
            # Both grid axes are independent -> shardable across v7x's 2 TCs.
            dimension_semantics=("parallel", "parallel"),
            # Explicit VMEM budget; double-buffered blocks stay << 32 MiB
            # (safe on v7x's 64 MiB physical VMEM as well as v5e/v6e).
            vmem_limit_bytes=32 * 1024 * 1024,
        ),
    )(x_flat)

    return out_flat.reshape(B, P, H, W)


if __name__ == "__main__":
    # Module config: in_dim (channels) = 4, num_prods = 2 (in_dim >= 2*num_prods).
    B, C, H, W = 2, 4, 16, 16
    num_prods = 2

    key = jax.random.PRNGKey(0)
    x = jax.random.normal(key, (B, C, H, W), dtype=jnp.float32)

    out = product_path(x, num_prods)
    out = jax.block_until_ready(out)

    # Reference (pure JAX) check of the PyTorch semantics.
    ref = jnp.stack(
        [x[:, 2 * i, ...] * x[:, 2 * i + 1, ...] for i in range(num_prods)], axis=1
    )
    assert out.shape == (B, num_prods, H, W)
    assert jnp.allclose(out, ref, atol=1e-6, rtol=1e-6)

    print("KERNEL_OK")
</pallas_src>

<mosaic_0001>
module attributes {stable_mosaic.version = 11 : i64} {
  func.func @kernel(%arg0: i32, %arg1: i32, %arg2: memref<1x4x256xf32, #tpu.memory_space<vmem>>, %arg3: memref<1x2x256xf32, #tpu.memory_space<vmem>>) attributes {dimension_semantics = [#tpu.dimension_semantics<parallel>, #tpu.dimension_semantics<parallel>], iteration_bounds = array<i64: 2, 1>, scalar_prefetch = 0 : i64, scratch_operands = 0 : i64, tpu.core_type = #tpu.core_type<tc>, window_params = [{transform_indices = @transform_0, window_bounds = array<i64: 1, 4, 256>}, {transform_indices = @transform_1, window_bounds = array<i64: 1, 2, 256>}]} {
    %c0 = arith.constant 0 : index
    %c0_0 = arith.constant 0 : index
    %c0_1 = arith.constant 0 : index
    %0 = vector.load %arg2[%c0, %c0_0, %c0_1] : memref<1x4x256xf32, #tpu.memory_space<vmem>>, vector<1x4x256xf32>
    %1 = vector.extract_strided_slice %0 {offsets = [0, 0, 0], sizes = [1, 1, 256], strides = [1, 1, 1]} : vector<1x4x256xf32> to vector<1x1x256xf32>
    %2 = vector.extract_strided_slice %0 {offsets = [0, 1, 0], sizes = [1, 1, 256], strides = [1, 1, 1]} : vector<1x4x256xf32> to vector<1x1x256xf32>
    %3 = arith.mulf %1, %2 : vector<1x1x256xf32>
    %4 = vector.extract_strided_slice %0 {offsets = [0, 2, 0], sizes = [1, 1, 256], strides = [1, 1, 1]} : vector<1x4x256xf32> to vector<1x1x256xf32>
    %5 = vector.extract_strided_slice %0 {offsets = [0, 3, 0], sizes = [1, 1, 256], strides = [1, 1, 1]} : vector<1x4x256xf32> to vector<1x1x256xf32>
    %6 = arith.mulf %4, %5 : vector<1x1x256xf32>
    %7 = tpu.concatenate %3, %6 in 1 : vector<1x1x256xf32>, vector<1x1x256xf32> -> vector<1x2x256xf32>
    %c0_2 = arith.constant 0 : index
    %c0_3 = arith.constant 0 : index
    %c0_4 = arith.constant 0 : index
    %8 = vector.load %arg3[%c0_2, %c0_3, %c0_4] : memref<1x2x256xf32, #tpu.memory_space<vmem>>, vector<1x2x256xf32>
    tpu.vector_store %arg3[%c0_2, %c0_3, %c0_4], %7 {strides = array<i32>} : memref<1x2x256xf32, #tpu.memory_space<vmem>>, vector<1x2x256xf32>,
    return
  }
  func.func @transform_0(%arg0: i32, %arg1: i32) -> (i32, i32, i32) {
    %c0_i32 = arith.constant 0 : i32
    %c0_i32_0 = arith.constant 0 : i32
    return %arg0, %c0_i32, %arg1 : i32, i32, i32
  }
  func.func @transform_1(%arg0: i32, %arg1: i32) -> (i32, i32, i32) {
    %c0_i32 = arith.constant 0 : i32
    %c0_i32_0 = arith.constant 0 : i32
    return %arg0, %c0_i32, %arg1 : i32, i32, i32
  }
}

</mosaic_0001>

<llo_original>
// kernel: tpu_custom_call.1
$region0: #{tpu_custom_call.1}
  #allocation0 [shape = 'u32[]', space=smem, size = 0x4, offset = 0x4, fixed_abs, tag = 'smem constant byte address 0x4 - core index']
  #allocation1 [shape = 'u32[72,128]{1,0:T(1,128)}', space=vmem, size = 0x9000, scoped, tag = 'internal scratch']
  %s0 = inlined_call_operand.hbm [shape: f32[2,4,256], index: 0, kind: input, shape index: {}]
  %s1 = inlined_call_operand.hbm [shape: f32[2,2,256], index: 1, kind: output, shape index: {}]
  %s2 = sld [smem:[#allocation0]]
  $region41: #{tpu_custom_call.1} parent=0
    _
  %s4 = ssub.s32 1, %s2
  %s5 = scalar_select 0, %s4, %s2
  $region1: #{tpu_custom_call.1} parent=0
    #allocation2 [shape = 'u8[8192]{0}', space=vmem, size = 0x2000, scoped, tag = 'input window, operand 0']
    #allocation3 [shape = 's32[2]{0}', space=sflag, size = 0x8, scoped, tag = 'scoped memory for tpu_custom_call.1']
    #allocation4 [shape = 's32[2]{0}', space=sflag, size = 0x8, scoped, tag = 'scoped memory for tpu_custom_call.1']
    #allocation5 [shape = 'u8[4096]{0}', space=vmem, size = 0x1000, scoped, tag = 'output window, operand 0']
    %6 = vsyncpa [#allocation3], 0
    %s7 = scalar_lea.sflag [#allocation3], 1
    %8 = vsyncpa %s7, 0
    %9 = vsyncpa [#allocation4], 0
    %s10 = scalar_lea.sflag [#allocation4], 1
    %11 = vsyncpa %s10, 0
    loop: start=0, step=1, limit=4
    $region2: #{tpu_custom_call.1} parent=1 // loop_pre_header
      _
    $region3: #{tpu_custom_call.1} parent=1 // loop_header
      %s13 = sphi 0, %s17
      %p14 = scmp.ge.s32.totalorder %s13, 4
      %s20 = sphi 0, %s32
      %s21 = sphi 0, %s28
      %s22 = sphi 0, %s20
      %s23 = sphi 0, %s21
      %s24 = sphi 0, %s22
      %s25 = sphi 0, %s23
      %s37 = sphi 0, %s39
      %s40 = sphi 0, %s37
      %s41 = sphi 0, %s40
      %s57 = sphi 0, %s41
      %s65 = sphi 0, %s67
      %s68 = sphi 0, %s65
      %s69 = sphi 0, %s68
      %s85 = sphi 0, %s69
    $region4: #{tpu_custom_call.1} parent=1 // loop_header_branch
      %16 = sbr.rel (%p14) target = $region8
    $region5: #{tpu_custom_call.1} parent=1 // loop_body
      %s18 = ssub.s32 %s13, 1
      %s19 = ssub.s32 %s13, 2
      %s26 = sadd.s32 1, %s21
      %p27 = scmp.ge.s32.totalorder %s26, 1
      %s28 = scalar_select %p27, 0, %s26
      %s29 = sadd.s32 1, %s20
      %s30 = scalar_select %p27, %s29, %s20
      %p31 = scmp.ge.s32.totalorder %s30, 2
      %s32 = scalar_select %p31, 0, %s30
      %s33 = ssub.s32 %s20, %s32
      %s34 = ssub.s32 %s21, %s28
      %s35 = sor.u32 %s33, %s34
      %p36 = scmp.eq.s32.totalorder %s35, 0
      %s38 = sadd.s32 %s37, 1
      %s39 = scalar_select %p36, %s37, %s38
      %p42 = pneg %p36
      %p43 = scmp.eq.s32.totalorder %s13, 1
      %p44 = por %p42, %p43
      %p45 = scmp.ne.s32.totalorder %s37, %s40
      %p46 = scmp.eq.s32.totalorder %s13, 0
      %p47 = por %p45, %p46
      %p48 = scmp.ne.s32.totalorder %s37, %s40
      %p49 = scmp.eq.s32.totalorder %s18, 1
      %p50 = por %p48, %p49
      %p51 = scmp.ne.s32.totalorder %s40, %s41
      %p52 = scmp.eq.s32.totalorder %s18, 0
      %p53 = por %p51, %p52
      %p54 = scmp.ne.s32.totalorder %s40, %s41
      %p55 = scmp.eq.s32.totalorder %s19, 1
      %p56 = por %p54, %p55
      %p58 = scmp.ne.s32.totalorder %s41, %s57
      %p59 = scmp.eq.s32.totalorder %s19, 0
      %p60 = por %p58, %p59
      %s61 = ssub.s32 %s20, %s32
      %s62 = ssub.s32 %s21, %s28
      %s63 = sor.u32 %s61, %s62
      %p64 = scmp.eq.s32.totalorder %s63, 0
      %s66 = sadd.s32 %s65, 1
      %s67 = scalar_select %p64, %s65, %s66
      %p70 = pneg %p64
      %p71 = scmp.eq.s32.totalorder %s13, 1
      %p72 = por %p70, %p71
      %p73 = scmp.ne.s32.totalorder %s65, %s68
      %p74 = scmp.eq.s32.totalorder %s13, 0
      %p75 = por %p73, %p74
      %p76 = scmp.ne.s32.totalorder %s65, %s68
      %p77 = scmp.eq.s32.totalorder %s18, 1
      %p78 = por %p76, %p77
      %p79 = scmp.ne.s32.totalorder %s68, %s69
      %p80 = scmp.eq.s32.totalorder %s18, 0
      %p81 = por %p79, %p80
      %p82 = scmp.ne.s32.totalorder %s68, %s69
      %p83 = scmp.eq.s32.totalorder %s19, 1
      %p84 = por %p82, %p83
      %p86 = scmp.ne.s32.totalorder %s69, %s85
      %p87 = scmp.eq.s32.totalorder %s19, 0
      %p88 = por %p86, %p87
      %p89 = scmp.le.s32.totalorder 1, %s13
      %p90 = scmp.lt.s32.totalorder %s13, 3
      %p91 = pnand %p89, %p90
      %p92 = pneg %p91
      // Predicated region
      $region9: #{tpu_custom_call.1} parent=5 // pred_check
        _
      $region10: #{tpu_custom_call.1} parent=5 // pred_check_branch
        %94 = sbr.rel (%p91) target = $region12
      $region11: #{tpu_custom_call.1} parent=5 // pred_region
        %s95 = ssub.s32 %s13, 1
      $region12: #{tpu_custom_call.1} parent=5 // pred_fallthru
        _
      %p96 = scmp.lt.s32.totalorder %s13, 2
      // Predicated region
      $region13: #{tpu_custom_call.1} parent=5 // pred_check
        %p97 = pneg %p96
      $region14: #{tpu_custom_call.1} parent=5 // pred_check_branch
        %99 = sbr.rel (%p97) target = $region16
      $region15: #{tpu_custom_call.1} parent=5 // pred_region
        // Predicated region
        $region17: #{tpu_custom_call.1} parent=15 // pred_check
          %p100 = pneg %p47
        $region18: #{tpu_custom_call.1} parent=15 // pred_check_branch
          %102 = sbr.rel (%p100) target = $region20
        $region19: #{tpu_custom_call.1} parent=15 // pred_region
          %s103 = sand.u32 %s37, 1
          %s104 = scalar_lea.sflag [#allocation3], %s103
          %s105 = sand.u32 %s37, 1
          %s106 = smul.addr %s105, 8
          %s107 = scalar_lea.vmem [#allocation2], %s106
          %s108 = smul.u32 2, %s21
          %110 = vsyncadd %s104, 0
          %s111 = smul.addr %s20, 2
          %s112 = sadd.s32 %s108, %s111
          %s113 = smul.addr %s112, 4
          %s114 = scalar_lea.hbm %s0, %s113
          %s116 = sshll.u32 %s114, 4
          %s117 = int_to_ptr.hbm [resolvable:$true] %s116
          %s118 = sshll.u32 %s107, 4
          %s119 = int_to_ptr.vmem [resolvable:$true] %s118
          %121 = dma.hbm_to_vmem [thread:$0]  %s117, 128, %s119, %s104
        $region20: #{tpu_custom_call.1} parent=15 // pred_fallthru
          _
      $region16: #{tpu_custom_call.1} parent=5 // pred_fallthru
        _
      %p122 = scmp.le.s32.totalorder 1, %s13
      %p123 = scmp.lt.s32.totalorder %s13, 3
      %p124 = pnand %p122, %p123
      %p125 = pneg %p124
      // Predicated region
      $region21: #{tpu_custom_call.1} parent=5 // pred_check
        _
      $region22: #{tpu_custom_call.1} parent=5 // pred_check_branch
        %127 = sbr.rel (%p124) target = $region24
      $region23: #{tpu_custom_call.1} parent=5 // pred_region
        %s128 = ssub.s32 %s13, 1
        %s129 = sand.u32 %s40, 1
        %s130 = scalar_lea.sflag [#allocation3], %s129
        %s131 = sand.u32 %s40, 1
        %s132 = smul.addr %s131, 8
        %s133 = scalar_lea.vmem [#allocation2], %s132
        // Predicated region
        $region25: #{tpu_custom_call.1} parent=23 // pred_check
          %p134 = pneg %p53
        $region26: #{tpu_custom_call.1} parent=23 // pred_check_branch
          %136 = sbr.rel (%p134) target = $region28
        $region27: #{tpu_custom_call.1} parent=23 // pred_region
          %138 = dma.done %s130, 128
        $region28: #{tpu_custom_call.1} parent=23 // pred_fallthru
          _
        %s139 = sand.u32 %s40, 1
        %s140 = scalar_lea.sflag [#allocation3], %s139
        %s141 = sand.u32 %s40, 1
        %s142 = smul.addr %s141, 8
        %s143 = scalar_lea.vmem [#allocation2], %s142
        %p144 = pneg %p53
        %p145 = pneg %p50
        %p146 = pneg %p81
        %p147 = pneg %p78
        %s148 = sand.u32 %s68, 1
        %s149 = scalar_lea.sflag [#allocation4], %s148
        %s150 = sand.u32 %s68, 1
        %s151 = smul.addr %s150, 4
        %s152 = scalar_lea.vmem [#allocation5], %s151
        %s153 = smul.u32 2, %s23
        %s154 = smul.u32 2, %s23
        %v155 = vld [vmem:[%s133] sm:$0xff]
        %v157 = vrot.slane %v155, 5
        %v158 = vrot.slane %v157, 4
        %v160 = vmul.f32 %v155, %v158
        %v162 = vperm.slane %v160, 0
        %v163 = vperm.slane %v160, 4
        %v166 = vperm.slane %v160, 2
        %v167 = vperm.slane %v160, 6
        %vm170 = vcmask 1040384
        %v171 = vsel %vm170, %v162, %v166
        %v172 = vsel %vm170, %v163, %v167
        %v175 = vrot.slane %v172, 6
        %vm176 = vcmask 1041408
        %v177 = vsel %vm176, %v171, %v175
        %179 = vst [vmem:[%s152] sm:$0xf] %v177
        %s180 = sand.u32 %s68, 1
        %s181 = scalar_lea.sflag [#allocation4], %s180
        %s182 = sand.u32 %s68, 1
        %s183 = smul.addr %s182, 4
        %s184 = scalar_lea.vmem [#allocation5], %s183
        // Predicated region
        $region29: #{tpu_custom_call.1} parent=23 // pred_check
          %p185 = pneg %p78
        $region30: #{tpu_custom_call.1} parent=23 // pred_check_branch
          %187 = sbr.rel (%p185) target = $region32
        $region31: #{tpu_custom_call.1} parent=23 // pred_region
          %s188 = smul.u32 2, %s23
          %190 = vsyncadd %s181, 0
          %s191 = smul.addr %s22, 2
          %s192 = sadd.s32 %s188, %s191
          %s193 = smul.addr %s192, 2
          %s194 = scalar_lea.hbm %s1, %s193
          %s196 = sshll.u32 %s184, 4
          %s197 = int_to_ptr.vmem [resolvable:$true] %s196
          %s198 = sshll.u32 %s194, 4
          %s199 = int_to_ptr.hbm [resolvable:$true] %s198
          %201 = dma.vmem_to_hbm [thread:$0]  %s197, 64, %s199, %s181
        $region32: #{tpu_custom_call.1} parent=23 // pred_fallthru
          _
      $region24: #{tpu_custom_call.1} parent=5 // pred_fallthru
        _
      %p202 = scmp.le.s32.totalorder 2, %s13
      // Predicated region
      $region33: #{tpu_custom_call.1} parent=5 // pred_check
        %p203 = pneg %p202
      $region34: #{tpu_custom_call.1} parent=5 // pred_check_branch
        %205 = sbr.rel (%p203) target = $region36
      $region35: #{tpu_custom_call.1} parent=5 // pred_region
        %s206 = ssub.s32 %s13, 2
        // Predicated region
        $region37: #{tpu_custom_call.1} parent=35 // pred_check
          %p207 = pneg %p84
        $region38: #{tpu_custom_call.1} parent=35 // pred_check_branch
          %209 = sbr.rel (%p207) target = $region40
        $region39: #{tpu_custom_call.1} parent=35 // pred_region
          %s210 = sand.u32 %s69, 1
          %s211 = scalar_lea.sflag [#allocation4], %s210
          %s212 = sand.u32 %s69, 1
          %s213 = smul.addr %s212, 4
          %s214 = scalar_lea.vmem [#allocation5], %s213
          %216 = dma.done %s211, 64
        $region40: #{tpu_custom_call.1} parent=35 // pred_fallthru
          _
      $region36: #{tpu_custom_call.1} parent=5 // pred_fallthru
        _
    $region6: #{tpu_custom_call.1} parent=1 // loop_footer
      %s17 = sadd.s32 1, %s13
    $region7: #{tpu_custom_call.1} parent=1 // loop_footer_branch
      %12 = sbr.rel target = $region3
    $region8: #{tpu_custom_call.1} parent=1 // loop_exit
      _
    %217 = vsyncpa [#allocation3], 1
    %s218 = scalar_lea.sflag [#allocation3], 1
    %219 = vsyncpa %s218, 1
    %220 = vsyncpa [#allocation4], 1
    %s221 = scalar_lea.sflag [#allocation4], 1
    %222 = vsyncpa %s221, 1

</llo_original>
